<compile_context>
chip_gen: v5e
topology: v5e:2x2
jax: 0.10.0
libtpu: 0.0.40
codegen_flags: <defaults>
</compile_context>

<pallas_src>
import functools

import jax
import jax.numpy as jnp
from jax.experimental import pallas as pl
from jax.experimental.pallas import tpu as pltpu


# ----------------------------------------------------------------------------
# Small helpers
# ----------------------------------------------------------------------------
def _vmem_capacity_bytes(default=128 << 20):
    try:
        info = pltpu.get_tpu_info()
        cap = getattr(info, "vmem_capacity_bytes", None)
        return int(cap) if cap else default
    except Exception:
        return default


def _mosaic_params(dimension_semantics, need_bytes):
    cap = _vmem_capacity_bytes()
    if need_bytes <= (16 << 20):
        vmem = None  # default scoped limit is plenty
    else:
        # Leave headroom for Mosaic internal scratch (esp. v7x's 64 MiB VMEM).
        vmem = int(min(need_bytes + (8 << 20), cap - (8 << 20)))
    return pltpu.CompilerParams(dimension_semantics=dimension_semantics,
                                vmem_limit_bytes=vmem)


def _pick_tile(n, cap=512):
    """Largest multiple-of-8 divisor of n that is <= cap (n itself if small)."""
    if n <= cap:
        return n
    for t in range(cap - cap % 8, 7, -8):
        if n % t == 0:
            return t
    return n


def _pick_cin_chunk(cin):
    cap = _vmem_capacity_bytes()
    target = 512 if cap >= (96 << 20) else 256     # v5e/v6e: 128 MiB, v7x: 64 MiB
    for c in (target, 256, 128):
        if c <= target and cin % c == 0:
            return c
    return cin


@functools.lru_cache(maxsize=None)
def _probe_roll():
    """Probe pltpu.roll on a rank-3 bf16 operand (sublane axis) and its
    direction.  Returns (supported, matches_np_roll)."""
    def kern(x_ref, o_ref):
        o_ref[...] = pltpu.roll(x_ref[...], 2, axis=1)

    try:
        x = jax.lax.broadcasted_iota(jnp.float32, (8, 16, 128), 1)
        x = x.astype(jnp.bfloat16)
        out = pl.pallas_call(
            kern, out_shape=jax.ShapeDtypeStruct((8, 16, 128), jnp.bfloat16))(x)
        v = float(jax.block_until_ready(out)[0, 0, 0])
        if v == 14.0:          # out[j] = in[j - 2]  -> np.roll semantics
            return True, True
        if v == 2.0:           # out[j] = in[j + 2]
            return True, False
        return False, True
    except Exception:
        return False, True


# ----------------------------------------------------------------------------
# Kernel 1: 1x1 conv (BN folded) + bias + ReLU, fused with global avg-pool.
#   x: (N, HWv, Cin) bf16,  w: (Cin, Cout) bf16,  b: (1, Cout) f32
#   outputs: y (N, HWv, Cout) bf16,  gap (N, 1, Cin) f32  (sum / (H*W))
# ----------------------------------------------------------------------------
def _conv1x1_gap_kernel(x_ref, w_ref, b_ref, o_ref, gap_ref, gacc_ref, *,
                        inv_count):
    m = pl.program_id(1)

    @pl.when(m == 0)
    def _init():
        gacc_ref[...] = jnp.zeros_like(gacc_ref)

    xb = x_ref[0]                                                # (tm, Cin)
    y = jnp.dot(xb, w_ref[...], preferred_element_type=jnp.float32)
    o_ref[0] = jnp.maximum(y + b_ref[...], 0.0).astype(o_ref.dtype)

    # Fused global average pool: channel sums while the block is resident
    # (padded width columns are zero, so they do not perturb the sum).
    gacc_ref[...] += jnp.sum(xb.astype(jnp.float32), axis=0, keepdims=True)

    @pl.when(m == pl.num_programs(1) - 1)
    def _fin():
        gap_ref[0] = gacc_ref[...] * inv_count


def conv1x1_gap_bn_relu(x3d, w, b, hw_valid):
    N, HWv, Cin = x3d.shape
    Cout = w.shape[1]
    tm = _pick_tile(HWv)
    kern = functools.partial(_conv1x1_gap_kernel, inv_count=1.0 / float(hw_valid))
    need = (2 * tm * Cin * 2 + Cin * Cout * 2 + 2 * tm * Cout * 2
            + 2 * Cin * 4 + (2 << 20))
    y, gap = pl.pallas_call(
        kern,
        out_shape=(jax.ShapeDtypeStruct((N, HWv, Cout), jnp.bfloat16),
                   jax.ShapeDtypeStruct((N, 1, Cin), jnp.float32)),
        grid_spec=pltpu.PrefetchScalarGridSpec(
            num_scalar_prefetch=0,
            grid=(N, HWv // tm),
            in_specs=[
                pl.BlockSpec((1, tm, Cin), lambda n, m: (n, m, 0)),
                pl.BlockSpec((Cin, Cout), lambda n, m: (0, 0)),
                pl.BlockSpec((1, Cout), lambda n, m: (0, 0)),
            ],
            out_specs=(pl.BlockSpec((1, tm, Cout), lambda n, m: (n, m, 0)),
                       pl.BlockSpec((1, 1, Cin), lambda n, m: (n, 0, 0))),
            scratch_shapes=[pltpu.VMEM((1, Cin), jnp.float32)],
        ),
        compiler_params=_mosaic_params(("parallel", "arbitrary"), need),
    )(x3d, w, b)
    return y, gap[:, 0, :]


# ----------------------------------------------------------------------------
# Kernel 2: 3x3 atrous conv (BN folded) + bias + ReLU.
# Grid = (N, Cin-chunks).  Per ky a cheap full-width row slab is loaded; the
# kx shift uses pltpu.roll (XLU) + an aligned prefix slice so no unaligned
# window relayout is materialized.  The 9 tap dots are chained and the f32
# accumulator is touched once per Cin chunk.
# ----------------------------------------------------------------------------
def _dconv3_kernel(xp_ref, w_ref, b_ref, o_ref, acc_ref, *,
                   H, Wv, d, cc, n_kc, use_roll, roll_like_np):
    kc = pl.program_id(1)
    Wpp = xp_ref.shape[2]
    k0 = pl.multiple_of(kc * cc, cc)

    total = None
    for ky in range(3):
        slab = xp_ref[0, ky * d:ky * d + H, :, :]           # (H, Wpp, cc)
        for kx in range(3):
            if kx == 0 or not use_roll:
                # kx == 0 is an aligned prefix slice; the 'not use_roll' path
                # is a correctness fallback (unaligned window slice).
                src = slab[:, kx * d:kx * d + Wv, :]
            else:
                shift = (Wpp - kx * d) if roll_like_np else (kx * d)
                src = pltpu.roll(slab, shift, axis=1)[:, :Wv, :]
            patch = src.reshape(H * Wv, cc)                  # layout-free (Wv%8==0)
            wk = w_ref[ky, kx, pl.ds(k0, cc), :]             # (cc, Cout)
            t = jnp.dot(patch, wk, preferred_element_type=jnp.float32)
            total = t if total is None else total + t

    if n_kc == 1:
        o_ref[0] = jnp.maximum(total + b_ref[...], 0.0).astype(o_ref.dtype)
    else:
        @pl.when(kc == 0)
        def _first():
            acc_ref[...] = total

        @pl.when(kc > 0)
        def _rest():
            acc_ref[...] += total

        @pl.when(kc == n_kc - 1)
        def _fin():
            o_ref[0] = jnp.maximum(acc_ref[...] + b_ref[...],
                                   0.0).astype(o_ref.dtype)


def dilated_conv3x3_bn_relu(xp, w, b, *, H, Wv, dilation, use_roll, roll_like_np):
    N, Hp, Wpp, Cin = xp.shape
    Cout = w.shape[-1]
    d = int(dilation)
    cc = _pick_cin_chunk(Cin)
    n_kc = Cin // cc
    kern = functools.partial(_dconv3_kernel, H=H, Wv=Wv, d=d, cc=cc, n_kc=n_kc,
                             use_roll=use_roll, roll_like_np=roll_like_np)
    need = (2 * Hp * Wpp * cc * 2          # double-buffered input chunk
            + 9 * Cin * Cout * 2           # resident weights
            + H * Wv * Cout * 4            # f32 accumulator scratch
            + 2 * H * Wv * Cout * 2        # output block
            + 3 * H * Wpp * cc * 2         # slab / rolled temporaries
            + H * Wv * Cout * 4            # chained-sum temporary
            + (2 << 20))
    # TODO(synk): add a 'parallel' row-block (halo) grid axis so v7x's second
    # TensorCore gets work at batch 1; today parallelism comes from N only.
    return pl.pallas_call(
        kern,
        out_shape=jax.ShapeDtypeStruct((N, H * Wv, Cout), jnp.bfloat16),
        grid_spec=pltpu.PrefetchScalarGridSpec(
            num_scalar_prefetch=0,
            grid=(N, n_kc),
            in_specs=[
                pl.BlockSpec((1, Hp, Wpp, cc), lambda n, k: (n, 0, 0, k)),
                # Full weight resident (constant index map): fetched once,
                # never re-streamed per image; Cin chunk sliced in-kernel.
                pl.BlockSpec((3, 3, Cin, Cout), lambda n, k: (0, 0, 0, 0)),
                pl.BlockSpec((1, Cout), lambda n, k: (0, 0)),
            ],
            out_specs=pl.BlockSpec((1, H * Wv, Cout), lambda n, k: (n, 0, 0)),
            scratch_shapes=[pltpu.VMEM((H * Wv, Cout), jnp.float32)],
        ),
        compiler_params=_mosaic_params(("parallel", "arbitrary"), need),
    )(xp, w, b)


# ----------------------------------------------------------------------------
# Kernel 3: fused concat + final 1x1 conv + BN + ReLU (no scratch).
# The 4 spatial branches hit the 4 row-chunks of the (5C, C) weight; the
# spatially constant global branch + final BN bias arrive as a per-image bias.
# ----------------------------------------------------------------------------
def _final_fused_kernel(x1_ref, x2_ref, x3_ref, x4_ref, wc_ref, gb_ref, o_ref):
    acc = jnp.dot(x1_ref[0], wc_ref[0], preferred_element_type=jnp.float32)
    acc = acc + jnp.dot(x2_ref[0], wc_ref[1], preferred_element_type=jnp.float32)
    acc = acc + jnp.dot(x3_ref[0], wc_ref[2], preferred_element_type=jnp.float32)
    acc = acc + jnp.dot(x4_ref[0], wc_ref[3], preferred_element_type=jnp.float32)
    o_ref[0] = jnp.maximum(acc + gb_ref[0], 0.0)


def final_concat_conv_bn_relu(x1, x2, x3, x4, wc_branches, gbias):
    N, HWv, C = x1.shape
    tm = _pick_tile(HWv)
    gb3 = gbias.reshape(N, 1, C).astype(jnp.float32)
    need = (2 * 4 * tm * C * 2 + 4 * C * C * 2 + 2 * tm * C * 4 + (2 << 20))
    bspec = pl.BlockSpec((1, tm, C), lambda n, m: (n, m, 0))
    return pl.pallas_call(
        _final_fused_kernel,
        out_shape=jax.ShapeDtypeStruct((N, HWv, C), jnp.float32),
        grid_spec=pltpu.PrefetchScalarGridSpec(
            num_scalar_prefetch=0,
            grid=(N, HWv // tm),
            in_specs=[bspec, bspec, bspec, bspec,
                      pl.BlockSpec((4, C, C), lambda n, m: (0, 0, 0)),
                      pl.BlockSpec((1, 1, C), lambda n, m: (n, 0, 0))],
            out_specs=pl.BlockSpec((1, tm, C), lambda n, m: (n, m, 0)),
        ),
        compiler_params=_mosaic_params(("parallel", "parallel"), need),
    )(x1, x2, x3, x4, wc_branches, gb3)


# ----------------------------------------------------------------------------
# Parameter construction (PyTorch-equivalent shapes & init, BN scale folded).
# ----------------------------------------------------------------------------
def _kaiming_normal(key, shape):
    # torch kaiming_normal_ defaults: fan_in, a=0 -> std = sqrt(2/fan_in)
    cout, cin, kh, kw = shape
    std = (2.0 / (cin * kh * kw)) ** 0.5
    return jax.random.normal(key, shape, jnp.float32) * std


def make_params(key, inplanes, planes, dilations, eps=1e-5):
    ks = jax.random.split(key, 6)
    scale = (1.0 + eps) ** -0.5                     # gamma=1, var=1
    zero_b = jnp.zeros((1, planes), jnp.float32)    # beta - mean*scale == 0

    def conv1x1_w(k, cin):
        return _kaiming_normal(k, (planes, cin, 1, 1))[:, :, 0, 0].T * scale

    def conv3x3_w(k):
        w = _kaiming_normal(k, (planes, inplanes, 3, 3))
        return jnp.transpose(w, (2, 3, 1, 0)) * scale      # (3,3,Cin,Cout)

    w1 = conv1x1_w(ks[0], inplanes)
    w2, w3, w4 = conv3x3_w(ks[1]), conv3x3_w(ks[2]), conv3x3_w(ks[3])
    w5 = conv1x1_w(ks[4], inplanes)
    wc = conv1x1_w(ks[5], 5 * planes)                      # (5C, C)
    wc_branches = jnp.stack([wc[i * planes:(i + 1) * planes] for i in range(4)], 0)
    wc_global = wc[4 * planes:]

    bf16 = jnp.bfloat16
    kparams = dict(
        w1=w1.astype(bf16), b1=zero_b,
        w2=w2.astype(bf16), b2=zero_b, d2=int(dilations[1]),
        w3=w3.astype(bf16), b3=zero_b, d3=int(dilations[2]),
        w4=w4.astype(bf16), b4=zero_b, d4=int(dilations[3]),
        w5=w5, b5=zero_b,                                  # global branch f32 (tiny)
        wc_b=wc_branches.astype(bf16), wc_g=wc_global, bc=zero_b,
    )
    rparams = dict(w1=w1, w2=w2, w3=w3, w4=w4, w5=w5, wc=wc,
                   d2=int(dilations[1]), d3=int(dilations[2]), d4=int(dilations[3]))
    return kparams, rparams


# ----------------------------------------------------------------------------
# Full ASPP forward (eval mode).
# ----------------------------------------------------------------------------
def aspp_forward(x_nchw, p):
    x = jnp.transpose(x_nchw, (0, 2, 3, 1)).astype(jnp.bfloat16)   # NHWC bf16
    N, H, W, Cin = x.shape
    Cout = p["b1"].shape[-1]

    # Pad width once to a multiple of 8 (zero columns) so all spatial flattens
    # are layout-free; the extra columns are sliced off at the end.
    Wv = ((W + 7) // 8) * 8
    if Wv != W:
        x = jnp.pad(x, ((0, 0), (0, 0), (0, Wv - W), (0, 0)))
    HWv = H * Wv

    # Branch 1 (1x1 conv) fused with the global average pool over valid H*W.
    x1, gap = conv1x1_gap_bn_relu(x.reshape(N, HWv, Cin), p["w1"], p["b1"], H * W)

    # Branches 2-4: per-branch padding (pad == dilation).
    use_roll, roll_like_np = _probe_roll()

    def branch(w, b, d):
        xp = jnp.pad(x, ((0, 0), (d, d), (d, d), (0, 0)))
        return dilated_conv3x3_bn_relu(xp, w, b, H=H, Wv=Wv, dilation=d,
                                       use_roll=use_roll,
                                       roll_like_np=roll_like_np)

    x2 = branch(p["w2"], p["b2"], p["d2"])
    x3 = branch(p["w3"], p["b3"], p["d3"])
    x4 = branch(p["w4"], p["b4"], p["d4"])

    # Global branch: tiny per-image matmuls in plain JAX.  Bilinear upsample of
    # a 1x1 map (align_corners=True) is a broadcast, so its contribution
    # through the final 1x1 conv collapses to a per-image bias.
    g = jnp.maximum(gap @ p["w5"] + p["b5"], 0.0)          # (N, Cout) f32
    gbias = p["bc"] + g @ p["wc_g"]                        # (N, Cout) f32

    # Fused concat + final 1x1 conv + BN + ReLU.  Dropout(0.5) == identity (eval).
    # TODO(synk): training-mode dropout / batch-statistics BN not implemented.
    y = final_concat_conv_bn_relu(x1, x2, x3, x4, p["wc_b"], gbias)   # (N,HWv,C)
    y = y.reshape(N, H, Wv, Cout)[:, :, :W, :]
    return jnp.transpose(y, (0, 3, 1, 2))                  # NCHW f32


# ----------------------------------------------------------------------------
# Pure-JAX (f32) reference for validation.
# ----------------------------------------------------------------------------
def aspp_reference(x_nchw, rp):
    x = x_nchw.astype(jnp.float32)
    relu = lambda a: jnp.maximum(a, 0.0)

    def conv1x1(v, w):                                     # w: (Cin, Cout)
        return jnp.einsum('nchw,co->nohw', v, w)

    def conv3x3(v, w, d):                                  # w: (3,3,Cin,Cout)
        return jax.lax.conv_general_dilated(
            v, jnp.transpose(w, (3, 2, 0, 1)), window_strides=(1, 1),
            padding=[(d, d), (d, d)], rhs_dilation=(d, d),
            dimension_numbers=('NCHW', 'OIHW', 'NCHW'))

    x1 = relu(conv1x1(x, rp['w1']))
    x2 = relu(conv3x3(x, rp['w2'], rp['d2']))
    x3 = relu(conv3x3(x, rp['w3'], rp['d3']))
    x4 = relu(conv3x3(x, rp['w4'], rp['d4']))
    g = relu(jnp.mean(x, axis=(2, 3)) @ rp['w5'])          # (N, Cout)
    x5 = jnp.broadcast_to(g[:, :, None, None], x1.shape)
    cat = jnp.concatenate([x1, x2, x3, x4, x5], axis=1)
    return relu(conv1x1(cat, rp['wc']))


if __name__ == "__main__":
    # Small, shape-consistent stand-in for production (inplanes=2048, planes=256).
    N, inplanes, H, W = 2, 32, 16, 16
    planes = 64
    dilations = [1, 6, 12, 18]        # output_stride == 16

    key = jax.random.PRNGKey(0)
    kp, kx = jax.random.split(key)
    params, ref_params = make_params(kp, inplanes, planes, dilations)
    x = jax.random.normal(kx, (N, inplanes, H, W), jnp.float32)

    out = jax.block_until_ready(aspp_forward(x, params))
    assert out.shape == (N, planes, H, W), out.shape
    assert bool(jnp.all(jnp.isfinite(out)))
    assert bool(jnp.all(out >= 0.0))       # final ReLU

    # Validate against the f32 reference (kernels use bf16 operands with f32
    # accumulation, so allow a few-percent tolerance).
    ref = aspp_reference(x, ref_params)
    err = float(jnp.max(jnp.abs(out.astype(jnp.float32) - ref)))
    scale = float(jnp.max(jnp.abs(ref))) + 1e-6
    assert err <= 0.08 * scale + 0.05, (err, scale)

    print("KERNEL_OK")
</pallas_src>

<mosaic_0001>
module attributes {stable_mosaic.version = 11 : i64} {
  func.func @_conv1x1_gap_kernel(%arg0: i32, %arg1: i32, %arg2: memref<1x256x32xbf16, #tpu.memory_space<vmem>>, %arg3: memref<32x64xbf16, #tpu.memory_space<vmem>>, %arg4: memref<1x64xf32, #tpu.memory_space<vmem>>, %arg5: memref<1x256x64xbf16, #tpu.memory_space<vmem>>, %arg6: memref<1x1x32xf32, #tpu.memory_space<vmem>>, %arg7: memref<1x32xf32, #tpu.memory_space<vmem>>) attributes {dimension_semantics = [#tpu.dimension_semantics<parallel>, #tpu.dimension_semantics<arbitrary>], iteration_bounds = array<i64: 2, 1>, scalar_prefetch = 0 : i64, scratch_operands = 1 : i64, tpu.core_type = #tpu.core_type<tc>, window_params = [{transform_indices = @transform_0, window_bounds = array<i64: 1, 256, 32>}, {pipeline_mode = #tpu.pipeline_mode<synchronous>, transform_indices = @transform_1, window_bounds = array<i64: 32, 64>}, {pipeline_mode = #tpu.pipeline_mode<synchronous>, transform_indices = @transform_2, window_bounds = array<i64: 1, 64>}, {transform_indices = @transform_3, window_bounds = array<i64: 1, 256, 64>}, {transform_indices = @transform_4, window_bounds = array<i64: 1, 1, 32>}]} {
    %c0_i32 = arith.constant 0 : i32
    %0 = arith.cmpi eq, %arg1, %c0_i32 : i32
    %1 = arith.extui %0 : i1 to i32
    %c0_i32_0 = arith.constant 0 : i32
    %2 = arith.cmpi ne, %1, %c0_i32_0 : i32
    scf.if %2 {
      %cst_18 = arith.constant 0.000000e+00 : f32
      %25 = vector.broadcast %cst_18 : f32 to vector<1x32xf32>
      %c0_19 = arith.constant 0 : index
      %c0_20 = arith.constant 0 : index
      %26 = vector.load %arg7[%c0_19, %c0_20] : memref<1x32xf32, #tpu.memory_space<vmem>>, vector<1x32xf32>
      tpu.vector_store %arg7[%c0_19, %c0_20], %25 {strides = array<i32>} : memref<1x32xf32, #tpu.memory_space<vmem>>, vector<1x32xf32>,
    } else {
    }
    %c0 = arith.constant 0 : index
    %c0_1 = arith.constant 0 : index
    %c0_2 = arith.constant 0 : index
    %3 = vector.load %arg2[%c0, %c0_1, %c0_2] : memref<1x256x32xbf16, #tpu.memory_space<vmem>>, vector<1x256x32xbf16>
    %4 = vector.shape_cast %3 : vector<1x256x32xbf16> to vector<256x32xbf16>
    %c0_3 = arith.constant 0 : index
    %c0_4 = arith.constant 0 : index
    %5 = vector.load %arg3[%c0_3, %c0_4] : memref<32x64xbf16, #tpu.memory_space<vmem>>, vector<32x64xbf16>
    %cst = arith.constant dense<0.000000e+00> : vector<256x64xf32>
    %6 = tpu.matmul %4, %5, %cst {dimension_numbers = #tpu.dot_dimension_numbers<[1], [0], [0], [1], [0, 0, 1, 1], [], []>} : vector<256x32xbf16>, vector<32x64xbf16>, vector<256x64xf32> -> vector<256x64xf32>
    %c0_5 = arith.constant 0 : index
    %c0_6 = arith.constant 0 : index
    %7 = vector.load %arg4[%c0_5, %c0_6] : memref<1x64xf32, #tpu.memory_space<vmem>>, vector<1x64xf32>
    %8 = vector.broadcast %7 : vector<1x64xf32> to vector<256x64xf32>
    %9 = arith.addf %6, %8 : vector<256x64xf32>
    %cst_7 = arith.constant 0.000000e+00 : f32
    %10 = vector.broadcast %cst_7 : f32 to vector<256x64xf32>
    %11 = arith.maximumf %9, %10 : vector<256x64xf32>
    %12 = arith.truncf %11 : vector<256x64xf32> to vector<256x64xbf16>
    %c0_8 = arith.constant 0 : index
    %c0_9 = arith.constant 0 : index
    %c0_10 = arith.constant 0 : index
    %13 = vector.load %arg5[%c0_8, %c0_9, %c0_10] : memref<1x256x64xbf16, #tpu.memory_space<vmem>>, vector<1x256x64xbf16>
    %14 = vector.shape_cast %13 : vector<1x256x64xbf16> to vector<256x64xbf16>
    %15 = vector.shape_cast %12 : vector<256x64xbf16> to vector<1x256x64xbf16>
    tpu.vector_store %arg5[%c0_8, %c0_9, %c0_10], %15 {strides = array<i32>} : memref<1x256x64xbf16, #tpu.memory_space<vmem>>, vector<1x256x64xbf16>,
    %c0_11 = arith.constant 0 : index
    %c0_12 = arith.constant 0 : index
    %16 = vector.load %arg7[%c0_11, %c0_12] : memref<1x32xf32, #tpu.memory_space<vmem>>, vector<1x32xf32>
    %17 = arith.extf %4 : vector<256x32xbf16> to vector<256x32xf32>
    %cst_13 = arith.constant dense<0.000000e+00> : vector<32xf32>
    %18 = vector.multi_reduction <add>, %17, %cst_13 [0] : vector<256x32xf32> to vector<32xf32>
    %19 = vector.shape_cast %18 : vector<32xf32> to vector<1x32xf32>
    %20 = arith.addf %16, %19 : vector<1x32xf32>
    %c0_14 = arith.constant 0 : index
    %c0_15 = arith.constant 0 : index
    %21 = vector.load %arg7[%c0_14, %c0_15] : memref<1x32xf32, #tpu.memory_space<vmem>>, vector<1x32xf32>
    tpu.vector_store %arg7[%c0_14, %c0_15], %20 {strides = array<i32>} : memref<1x32xf32, #tpu.memory_space<vmem>>, vector<1x32xf32>,
    %c0_i32_16 = arith.constant 0 : i32
    %22 = arith.cmpi eq, %arg1, %c0_i32_16 : i32
    %23 = arith.extui %22 : i1 to i32
    %c0_i32_17 = arith.constant 0 : i32
    %24 = arith.cmpi ne, %23, %c0_i32_17 : i32
    scf.if %24 {
      %c0_18 = arith.constant 0 : index
      %c0_19 = arith.constant 0 : index
      %25 = vector.load %arg7[%c0_18, %c0_19] : memref<1x32xf32, #tpu.memory_space<vmem>>, vector<1x32xf32>
      %cst_20 = arith.constant 3.906250e-03 : f32
      %26 = vector.broadcast %cst_20 : f32 to vector<1x32xf32>
      %27 = arith.mulf %25, %26 : vector<1x32xf32>
      %c0_21 = arith.constant 0 : index
      %c0_22 = arith.constant 0 : index
      %c0_23 = arith.constant 0 : index
      %28 = vector.load %arg6[%c0_21, %c0_22, %c0_23] : memref<1x1x32xf32, #tpu.memory_space<vmem>>, vector<1x1x32xf32>
      %29 = vector.shape_cast %28 : vector<1x1x32xf32> to vector<1x32xf32>
      %30 = vector.shape_cast %27 : vector<1x32xf32> to vector<1x1x32xf32>
      tpu.vector_store %arg6[%c0_21, %c0_22, %c0_23], %30 {strides = array<i32>} : memref<1x1x32xf32, #tpu.memory_space<vmem>>, vector<1x1x32xf32>,
    } else {
    }
    return
  }
  func.func @transform_0(%arg0: i32, %arg1: i32) -> (i32, i32, i32) {
    %c0_i32 = arith.constant 0 : i32
    %c0_i32_0 = arith.constant 0 : i32
    return %arg0, %arg1, %c0_i32 : i32, i32, i32
  }
  func.func @transform_1(%arg0: i32, %arg1: i32) -> (i32, i32) {
    %c0_i32 = arith.constant 0 : i32
    %c0_i32_0 = arith.constant 0 : i32
    %c0_i32_1 = arith.constant 0 : i32
    return %c0_i32, %c0_i32_0 : i32, i32
  }
  func.func @transform_2(%arg0: i32, %arg1: i32) -> (i32, i32) {
    %c0_i32 = arith.constant 0 : i32
    %c0_i32_0 = arith.constant 0 : i32
    %c0_i32_1 = arith.constant 0 : i32
    return %c0_i32, %c0_i32_0 : i32, i32
  }
  func.func @transform_3(%arg0: i32, %arg1: i32) -> (i32, i32, i32) {
    %c0_i32 = arith.constant 0 : i32
    %c0_i32_0 = arith.constant 0 : i32
    return %arg0, %arg1, %c0_i32 : i32, i32, i32
  }
  func.func @transform_4(%arg0: i32, %arg1: i32) -> (i32, i32, i32) {
    %c0_i32 = arith.constant 0 : i32
    %c0_i32_0 = arith.constant 0 : i32
    %c0_i32_1 = arith.constant 0 : i32
    return %arg0, %c0_i32, %c0_i32_0 : i32, i32, i32
  }
}

</mosaic_0001>

<llo_original>
// kernel: tpu_custom_call.1
$region0: #{tpu_custom_call.1}
  #allocation0 [shape = 'u32[]', space=smem, size = 0x4, offset = 0x4, fixed_abs, tag = 'smem constant byte address 0x4 - core index']
  #allocation1 [shape = 'u32[72,128]{1,0:T(1,128)}', space=vmem, size = 0x9000, scoped, tag = 'internal scratch']
  #allocation2 [shape = 'f32[1,32]{1,0:T(1,128)}', space=vmem, size = 0x200, scoped, tag = 'scratch operand']
  %s0 = inlined_call_operand.vmem [shape: bf16[2,256,32], index: 0, kind: input, shape index: {}]
  %s1 = inlined_call_operand.vmem [shape: bf16[32,64], index: 1, kind: input, shape index: {}]
  %s2 = inlined_call_operand.vmem [shape: f32[1,64], index: 2, kind: input, shape index: {}]
  %s3 = inlined_call_operand.vmem [shape: bf16[2,256,64], index: 3, kind: output, shape index: {0}]
  %s4 = inlined_call_operand.hbm [shape: f32[2,1,32], index: 4, kind: output, shape index: {1}]
  %5 = xla_tuple %s3, %s4
  %s6 = sld [smem:[#allocation0]]
  $region61: #{tpu_custom_call.1} parent=0
    _
  %s8 = ssub.s32 1, %s6
  %s9 = scalar_select 0, %s8, %s6
  $region1: #{tpu_custom_call.1} parent=0
    #allocation3 [shape = 'u8[1024]{0}', space=vmem, size = 0x400, scoped, tag = 'output window, operand 1']
    #allocation4 [shape = 's32[2]{0}', space=sflag, size = 0x8, scoped, tag = 'scoped memory for tpu_custom_call.1']
    %10 = vsyncpa [#allocation4], 0
    %s11 = scalar_lea.sflag [#allocation4], 1
    %12 = vsyncpa %s11, 0
    loop: start=0, step=1, limit=4
    $region2: #{tpu_custom_call.1} parent=1 // loop_pre_header
      _
    $region3: #{tpu_custom_call.1} parent=1 // loop_header
      %s14 = sphi 0, %s18
      %p15 = scmp.ge.s32.totalorder %s14, 4
      %s21 = sphi 0, %s33
      %s22 = sphi 0, %s29
      %s23 = sphi 0, %s21
      %s24 = sphi 0, %s22
      %s25 = sphi 0, %s23
      %s26 = sphi 0, %s24
      %s38 = sphi 0, %s40
      %s41 = sphi 0, %s38
      %s42 = sphi 0, %s41
      %s58 = sphi 0, %s42
      %s62 = sphi 0, %s62
      %s64 = sphi 0, %s62
      %s65 = sphi 0, %s64
      %s79 = sphi 0, %s65
      %s83 = sphi 0, %s83
      %s85 = sphi 0, %s83
      %s86 = sphi 0, %s85
      %s100 = sphi 0, %s86
      %s108 = sphi 0, %s110
      %s111 = sphi 0, %s108
      %s112 = sphi 0, %s111
      %s128 = sphi 0, %s112
      %s134 = sphi 0, %s136
      %s137 = sphi 0, %s134
      %s138 = sphi 0, %s137
      %s154 = sphi 0, %s138
    $region4: #{tpu_custom_call.1} parent=1 // loop_header_branch
      %17 = sbr.rel (%p15) target = $region8
    $region5: #{tpu_custom_call.1} parent=1 // loop_body
      %s19 = ssub.s32 %s14, 1
      %s20 = ssub.s32 %s14, 2
      %s27 = sadd.s32 1, %s22
      %p28 = scmp.ge.s32.totalorder %s27, 1
      %s29 = scalar_select %p28, 0, %s27
      %s30 = sadd.s32 1, %s21
      %s31 = scalar_select %p28, %s30, %s21
      %p32 = scmp.ge.s32.totalorder %s31, 2
      %s33 = scalar_select %p32, 0, %s31
      %s34 = ssub.s32 %s21, %s33
      %s35 = ssub.s32 %s22, %s29
      %s36 = sor.u32 %s34, %s35
      %p37 = scmp.eq.s32.totalorder %s36, 0
      %s39 = sadd.s32 %s38, 1
      %s40 = scalar_select %p37, %s38, %s39
      %p43 = pneg %p37
      %p44 = scmp.eq.s32.totalorder %s14, 1
      %p45 = por %p43, %p44
      %p46 = scmp.ne.s32.totalorder %s38, %s41
      %p47 = scmp.eq.s32.totalorder %s14, 0
      %p48 = por %p46, %p47
      %p49 = scmp.ne.s32.totalorder %s38, %s41
      %p50 = scmp.eq.s32.totalorder %s19, 1
      %p51 = por %p49, %p50
      %p52 = scmp.ne.s32.totalorder %s41, %s42
      %p53 = scmp.eq.s32.totalorder %s19, 0
      %p54 = por %p52, %p53
      %p55 = scmp.ne.s32.totalorder %s41, %s42
      %p56 = scmp.eq.s32.totalorder %s20, 1
      %p57 = por %p55, %p56
      %p59 = scmp.ne.s32.totalorder %s42, %s58
      %p60 = scmp.eq.s32.totalorder %s20, 0
      %p61 = por %p59, %p60
      %s63 = sadd.s32 %s62, 1
      %p66 = scmp.eq.s32.totalorder %s14, 1
      %p67 = scmp.ne.s32.totalorder %s62, %s64
      %p68 = scmp.eq.s32.totalorder %s14, 0
      %p69 = por %p67, %p68
      %p70 = scmp.ne.s32.totalorder %s62, %s64
      %p71 = scmp.eq.s32.totalorder %s19, 1
      %p72 = por %p70, %p71
      %p73 = scmp.ne.s32.totalorder %s64, %s65
      %p74 = scmp.eq.s32.totalorder %s19, 0
      %p75 = por %p73, %p74
      %p76 = scmp.ne.s32.totalorder %s64, %s65
      %p77 = scmp.eq.s32.totalorder %s20, 1
      %p78 = por %p76, %p77
      %p80 = scmp.ne.s32.totalorder %s65, %s79
      %p81 = scmp.eq.s32.totalorder %s20, 0
      %p82 = por %p80, %p81
      %s84 = sadd.s32 %s83, 1
      %p87 = scmp.eq.s32.totalorder %s14, 1
      %p88 = scmp.ne.s32.totalorder %s83, %s85
      %p89 = scmp.eq.s32.totalorder %s14, 0
      %p90 = por %p88, %p89
      %p91 = scmp.ne.s32.totalorder %s83, %s85
      %p92 = scmp.eq.s32.totalorder %s19, 1
      %p93 = por %p91, %p92
      %p94 = scmp.ne.s32.totalorder %s85, %s86
      %p95 = scmp.eq.s32.totalorder %s19, 0
      %p96 = por %p94, %p95
      %p97 = scmp.ne.s32.totalorder %s85, %s86
      %p98 = scmp.eq.s32.totalorder %s20, 1
      %p99 = por %p97, %p98
      %p101 = scmp.ne.s32.totalorder %s86, %s100
      %p102 = scmp.eq.s32.totalorder %s20, 0
      %p103 = por %p101, %p102
      %s104 = ssub.s32 %s21, %s33
      %s105 = ssub.s32 %s22, %s29
      %s106 = sor.u32 %s104, %s105
      %p107 = scmp.eq.s32.totalorder %s106, 0
      %s109 = sadd.s32 %s108, 1
      %s110 = scalar_select %p107, %s108, %s109
      %p113 = pneg %p107
      %p114 = scmp.eq.s32.totalorder %s14, 1
      %p115 = por %p113, %p114
      %p116 = scmp.ne.s32.totalorder %s108, %s111
      %p117 = scmp.eq.s32.totalorder %s14, 0
      %p118 = por %p116, %p117
      %p119 = scmp.ne.s32.totalorder %s108, %s111
      %p120 = scmp.eq.s32.totalorder %s19, 1
      %p121 = por %p119, %p120
      %p122 = scmp.ne.s32.totalorder %s111, %s112
      %p123 = scmp.eq.s32.totalorder %s19, 0
      %p124 = por %p122, %p123
      %p125 = scmp.ne.s32.totalorder %s111, %s112
      %p126 = scmp.eq.s32.totalorder %s20, 1
      %p127 = por %p125, %p126
      %p129 = scmp.ne.s32.totalorder %s112, %s128
      %p130 = scmp.eq.s32.totalorder %s20, 0
      %p131 = por %p129, %p130
      %s132 = ssub.s32 %s21, %s33
      %p133 = scmp.eq.s32.totalorder %s132, 0
      %s135 = sadd.s32 %s134, 1
      %s136 = scalar_select %p133, %s134, %s135
      %p139 = pneg %p133
      %p140 = scmp.eq.s32.totalorder %s14, 1
      %p141 = por %p139, %p140
      %p142 = scmp.ne.s32.totalorder %s134, %s137
      %p143 = scmp.eq.s32.totalorder %s14, 0
      %p144 = por %p142, %p143
      %p145 = scmp.ne.s32.totalorder %s134, %s137
      %p146 = scmp.eq.s32.totalorder %s19, 1
      %p147 = por %p145, %p146
      %p148 = scmp.ne.s32.totalorder %s137, %s138
      %p149 = scmp.eq.s32.totalorder %s19, 0
      %p150 = por %p148, %p149
      %p151 = scmp.ne.s32.totalorder %s137, %s138
      %p152 = scmp.eq.s32.totalorder %s20, 1
      %p153 = por %p151, %p152
      %p155 = scmp.ne.s32.totalorder %s138, %s154
      %p156 = scmp.eq.s32.totalorder %s20, 0
      %p157 = por %p155, %p156
      %p158 = scmp.le.s32.totalorder 1, %s14
      %p159 = scmp.lt.s32.totalorder %s14, 3
      %p160 = pnand %p158, %p159
      %p161 = pneg %p160
      // Predicated region
      $region9: #{tpu_custom_call.1} parent=5 // pred_check
        _
      $region10: #{tpu_custom_call.1} parent=5 // pred_check_branch
        %163 = sbr.rel (%p160) target = $region12
      $region11: #{tpu_custom_call.1} parent=5 // pred_region
        %s164 = ssub.s32 %s14, 1
        // Predicated region
        $region13: #{tpu_custom_call.1} parent=11 // pred_check
          %p165 = pneg %p75
        $region14: #{tpu_custom_call.1} parent=11 // pred_check_branch
          %167 = sbr.rel (%p165) target = $region16
        $region15: #{tpu_custom_call.1} parent=11 // pred_region
          _
        $region16: #{tpu_custom_call.1} parent=11 // pred_fallthru
          _
        // Predicated region
        $region17: #{tpu_custom_call.1} parent=11 // pred_check
          %p168 = pneg %p96
        $region18: #{tpu_custom_call.1} parent=11 // pred_check_branch
          %170 = sbr.rel (%p168) target = $region20
        $region19: #{tpu_custom_call.1} parent=11 // pred_region
          _
        $region20: #{tpu_custom_call.1} parent=11 // pred_fallthru
          _
      $region12: #{tpu_custom_call.1} parent=5 // pred_fallthru
        _
      %p171 = scmp.lt.s32.totalorder %s14, 2
      // Predicated region
      $region21: #{tpu_custom_call.1} parent=5 // pred_check
        %p172 = pneg %p171
      $region22: #{tpu_custom_call.1} parent=5 // pred_check_branch
        %174 = sbr.rel (%p172) target = $region24
      $region23: #{tpu_custom_call.1} parent=5 // pred_region
        // Predicated region
        $region25: #{tpu_custom_call.1} parent=23 // pred_check
          %p175 = pneg %p48
        $region26: #{tpu_custom_call.1} parent=23 // pred_check_branch
          %177 = sbr.rel (%p175) target = $region28
        $region27: #{tpu_custom_call.1} parent=23 // pred_region
          %s178 = smul.u32 32, %s22
          %p179 = scmp.lt.s32.totalorder %s21, 1
          %s180 = scalar_select %p179, %s21, 1
          %p181 = scmp.lt.s32.totalorder %s178, 31
          %s182 = scalar_select %p181, %s178, 31
          %s183 = smul.addr %s180, 32
          %s184 = sadd.s32 %s182, %s183
          %s185 = smul.addr %s184, 4
          %s186 = scalar_lea.vmem %s0, %s185
          %s187 = smul.u32 32, %s22
        $region28: #{tpu_custom_call.1} parent=23 // pred_fallthru
          _
      $region24: #{tpu_custom_call.1} parent=5 // pred_fallthru
        _
      %p188 = scmp.le.s32.totalorder 1, %s14
      %p189 = scmp.lt.s32.totalorder %s14, 3
      %p190 = pnand %p188, %p189
      %p191 = pneg %p190
      // Predicated region
      $region29: #{tpu_custom_call.1} parent=5 // pred_check
        _
      $region30: #{tpu_custom_call.1} parent=5 // pred_check_branch
        %193 = sbr.rel (%p190) target = $region32
      $region31: #{tpu_custom_call.1} parent=5 // pred_region
        %s194 = ssub.s32 %s14, 1
        %s195 = smul.u32 32, %s24
        %p196 = scmp.lt.s32.totalorder %s23, 1
        %s197 = scalar_select %p196, %s23, 1
        %p198 = scmp.lt.s32.totalorder %s195, 31
        %s199 = scalar_select %p198, %s195, 31
        %s200 = smul.addr %s197, 32
        %s201 = sadd.s32 %s199, %s200
        %s202 = smul.addr %s201, 4
        %s203 = scalar_lea.vmem %s0, %s202
        %p204 = pneg %p54
        %p205 = pneg %p51
        %p206 = pneg %p75
        %p207 = pneg %p72
        %p208 = pneg %p96
        %p209 = pneg %p93
        %p210 = pneg %p124
        %p211 = pneg %p121
        %s212 = smul.u32 32, %s24
        %p213 = scmp.lt.s32.totalorder %s23, 1
        %s214 = scalar_select %p213, %s23, 1
        %p215 = scmp.lt.s32.totalorder %s212, 31
        %s216 = scalar_select %p215, %s212, 31
        %s217 = smul.addr %s214, 32
        %s218 = sadd.s32 %s216, %s217
        %s219 = smul.addr %s218, 4
        %s220 = scalar_lea.vmem %s3, %s219
        %p221 = pneg %p150
        %p222 = pneg %p147
        %s223 = sand.u32 %s137, 1
        %s224 = scalar_lea.sflag [#allocation4], %s223
        %s225 = sand.u32 %s137, 1
        %s226 = scalar_lea.vmem [#allocation3], %s225
        %s227 = smul.u32 32, %s24
        %p228 = scmp.lt.s32.totalorder %s23, 1
        %s229 = scalar_select %p228, %s23, 1
        %p230 = scmp.lt.s32.totalorder %s227, 31
        %s231 = scalar_select %p230, %s227, 31
        %s232 = smul.addr %s229, 32
        %s233 = sadd.s32 %s231, %s232
        %s234 = smul.addr %s233, 4
        %s235 = scalar_lea.vmem %s0, %s234
        %s236 = smul.u32 32, %s24
        %s237 = smul.u32 32, %s24
        %p238 = scmp.lt.s32.totalorder %s23, 1
        %s239 = scalar_select %p238, %s23, 1
        %p240 = scmp.lt.s32.totalorder %s237, 31
        %s241 = scalar_select %p240, %s237, 31
        %s242 = smul.addr %s239, 32
        %s243 = sadd.s32 %s241, %s242
        %s244 = smul.addr %s243, 4
        %s245 = scalar_lea.vmem %s3, %s244
        %s246 = smul.u32 32, %s24
        %p248 = scmp.eq.s32.totalorder %s24, 0
        // Predicated region
        $region33: #{tpu_custom_call.1} parent=31 // pred_check
          %p249 = pneg %p248
        $region34: #{tpu_custom_call.1} parent=31 // pred_check_branch
          %251 = sbr.rel (%p249) target = $region36
        $region35: #{tpu_custom_call.1} parent=31 // pred_region
          %vm252 = vcmask 253952
          %253 = vst.msk [vmem:[#allocation2] sm:$0x1] %vm252, 0.0
        $region36: #{tpu_custom_call.1} parent=31 // pred_fallthru
          _
        %v254 = vld [vmem:[%s235] sm:$0xf]
        %v255 = vld [vmem:[%s235 + $0x4] sm:$0xf]
        %v256 = vld [vmem:[%s235 + $0x8] sm:$0xf]
        %v257 = vld [vmem:[%s235 + $0xc] sm:$0xf]
        %v258 = vld [vmem:[%s235 + $0x10] sm:$0xf]
        %v259 = vld [vmem:[%s235 + $0x14] sm:$0xf]
        %v260 = vld [vmem:[%s235 + $0x18] sm:$0xf]
        %v261 = vld [vmem:[%s235 + $0x1c] sm:$0xf]
        %v262 = vld [vmem:[%s235 + $0x20] sm:$0xf]
        %v263 = vld [vmem:[%s235 + $0x24] sm:$0xf]
        %v264 = vld [vmem:[%s235 + $0x28] sm:$0xf]
        %v265 = vld [vmem:[%s235 + $0x2c] sm:$0xf]
        %v266 = vld [vmem:[%s235 + $0x30] sm:$0xf]
        %v267 = vld [vmem:[%s235 + $0x34] sm:$0xf]
        %v268 = vld [vmem:[%s235 + $0x38] sm:$0xf]
        %v269 = vld [vmem:[%s235 + $0x3c] sm:$0xf]
        %v270 = vld [vmem:[%s235 + $0x40] sm:$0xf]
        %v271 = vld [vmem:[%s235 + $0x44] sm:$0xf]
        %v272 = vld [vmem:[%s235 + $0x48] sm:$0xf]
        %v273 = vld [vmem:[%s235 + $0x4c] sm:$0xf]
        %v274 = vld [vmem:[%s235 + $0x50] sm:$0xf]
        %v275 = vld [vmem:[%s235 + $0x54] sm:$0xf]
        %v276 = vld [vmem:[%s235 + $0x58] sm:$0xf]
        %v277 = vld [vmem:[%s235 + $0x5c] sm:$0xf]
        %v278 = vld [vmem:[%s235 + $0x60] sm:$0xf]
        %v279 = vld [vmem:[%s235 + $0x64] sm:$0xf]
        %v280 = vld [vmem:[%s235 + $0x68] sm:$0xf]
        %v281 = vld [vmem:[%s235 + $0x6c] sm:$0xf]
        %v282 = vld [vmem:[%s235 + $0x70] sm:$0xf]
        %v283 = vld [vmem:[%s235 + $0x74] sm:$0xf]
        %v284 = vld [vmem:[%s235 + $0x78] sm:$0xf]
        %v285 = vld [vmem:[%s235 + $0x7c] sm:$0xf]
        %v286 = vld [vmem:[%s1] sm:$0xf]
        %v287 = vld [vmem:[%s1 + $0x4] sm:$0xf]
        %v288 = vld [vmem:[%s1 + $0x8] sm:$0xf]
        %v289 = vld [vmem:[%s1 + $0xc] sm:$0xf]
        %v290 = vld [vmem:[%s2] sm:$0x1]
        %v292 = vperm.slane %v290, 0
        %v326 = vunpack.c.l.b16 %v254
        %v327 = vunpack.c.l.b16 %v255
        %v328 = vunpack.c.l.b16 %v256
        %v329 = vunpack.c.l.b16 %v257
        %v330 = vunpack.c.l.b16 %v258
        %v331 = vunpack.c.l.b16 %v259
        %v332 = vunpack.c.l.b16 %v260
        %v333 = vunpack.c.l.b16 %v261
        %v334 = vunpack.c.l.b16 %v262
        %v335 = vunpack.c.l.b16 %v263
        %v336 = vunpack.c.l.b16 %v264
        %v337 = vunpack.c.l.b16 %v265
        %v338 = vunpack.c.l.b16 %v266
        %v339 = vunpack.c.l.b16 %v267
        %v340 = vunpack.c.l.b16 %v268
        %v341 = vunpack.c.l.b16 %v269
        %v342 = vunpack.c.l.b16 %v270
        %v343 = vunpack.c.l.b16 %v271
        %v344 = vunpack.c.l.b16 %v272
        %v345 = vunpack.c.l.b16 %v273
        %v346 = vunpack.c.l.b16 %v274
        %v347 = vunpack.c.l.b16 %v275
        %v348 = vunpack.c.l.b16 %v276
        %v349 = vunpack.c.l.b16 %v277
        %v350 = vunpack.c.l.b16 %v278
        %v351 = vunpack.c.l.b16 %v279
        %v352 = vunpack.c.l.b16 %v280
        %v353 = vunpack.c.l.b16 %v281
        %v354 = vunpack.c.l.b16 %v282
        %v355 = vunpack.c.l.b16 %v283
        %v356 = vunpack.c.l.b16 %v284
        %v357 = vunpack.c.l.b16 %v285
        %v358 = vpack.c.b16 %v327, %v326
        %v359 = vpack.c.b16 %v329, %v328
        %v360 = vpack.c.b16 %v331, %v330
        %v361 = vpack.c.b16 %v333, %v332
        %v362 = vpack.c.b16 %v335, %v334
        %v363 = vpack.c.b16 %v337, %v336
        %v364 = vpack.c.b16 %v339, %v338
        %v365 = vpack.c.b16 %v341, %v340
        %v366 = vpack.c.b16 %v343, %v342
        %v367 = vpack.c.b16 %v345, %v344
        %v368 = vpack.c.b16 %v347, %v346
        %v369 = vpack.c.b16 %v349, %v348
        %v370 = vpack.c.b16 %v351, %v350
        %v371 = vpack.c.b16 %v353, %v352
        %v372 = vpack.c.b16 %v355, %v354
        %v373 = vpack.c.b16 %v357, %v356
        %v378 = vunpack.c.l.b16 %v286
        %v379 = vunpack.c.l.b16 %v287
        %v380 = vunpack.c.l.b16 %v288
        %v381 = vunpack.c.l.b16 %v289
        %v382 = vpack.c.b16 %v379, %v378
        %v383 = vpack.c.b16 %v381, %v380
        %vm386 = vcmask 261120
        %v388 = vsel %vm386, %v358, 0
        %v391 = vsel %vm386, %v359, 0
        %v394 = vsel %vm386, %v360, 0
        %v397 = vsel %vm386, %v361, 0
        %v400 = vsel %vm386, %v362, 0
        %v403 = vsel %vm386, %v363, 0
        %v406 = vsel %vm386, %v364, 0
        %v409 = vsel %vm386, %v365, 0
        %v412 = vsel %vm386, %v366, 0
        %v415 = vsel %vm386, %v367, 0
        %v418 = vsel %vm386, %v368, 0
        %v421 = vsel %vm386, %v369, 0
        %v424 = vsel %vm386, %v370, 0
        %v427 = vsel %vm386, %v371, 0
        %v430 = vsel %vm386, %v372, 0
        %v433 = vsel %vm386, %v373, 0
        %435 = vmatpush.bf16.msra.mxu0 0
        %436 = vmatpush.bf16.msra.mxu0 0
        %437 = vmatpush.bf16.msra.mxu0 0
        %438 = vmatpush.bf16.msra.mxu0 0
        %439 = vmatpush.bf16.msra.mxu0 0
        %440 = vmatpush.bf16.msra.mxu0 0
        %441 = vmatpush.bf16.msra.mxu0 %v383
        %442 = vmatpush.bf16.msra.mxu0 %v382
        %443 = vmatmul.bf16.gmra.mxu0 %v388
        %v444 = vpop.f32.mrf.mxu0
        %v445 = vadd.f32 %v292, %v444
        %v446 = vpop.f32.mrf.mxu0
        %v447 = vadd.f32 %v292, %v446
        %448 = vmatmul.bf16.gmra.mxu0 %v391
        %v449 = vpop.f32.mrf.mxu0
        %v450 = vadd.f32 %v292, %v449
        %v451 = vpop.f32.mrf.mxu0
        %v452 = vadd.f32 %v292, %v451
        %453 = vmatmul.bf16.gmra.mxu0 %v394
        %v454 = vpop.f32.mrf.mxu0
        %v455 = vadd.f32 %v292, %v454
        %v456 = vpop.f32.mrf.mxu0
        %v457 = vadd.f32 %v292, %v456
        %458 = vmatmul.bf16.gmra.mxu0 %v397
        %v459 = vpop.f32.mrf.mxu0
        %v460 = vadd.f32 %v292, %v459
        %v461 = vpop.f32.mrf.mxu0
        %v462 = vadd.f32 %v292, %v461
        %463 = vmatmul.bf16.gmra.mxu0 %v400
        %v464 = vpop.f32.mrf.mxu0
        %v465 = vadd.f32 %v292, %v464
        %v466 = vpop.f32.mrf.mxu0
        %v467 = vadd.f32 %v292, %v466
        %468 = vmatmul.bf16.gmra.mxu0 %v403
        %v469 = vpop.f32.mrf.mxu0
        %v470 = vadd.f32 %v292, %v469
        %v471 = vpop.f32.mrf.mxu0
        %v472 = vadd.f32 %v292, %v471
        %473 = vmatmul.bf16.gmra.mxu0 %v406
        %v474 = vpop.f32.mrf.mxu0
        %v475 = vadd.f32 %v292, %v474
        %v476 = vpop.f32.mrf.mxu0
        %v477 = vadd.f32 %v292, %v476
        %478 = vmatmul.bf16.gmra.mxu0 %v409
        %v479 = vpop.f32.mrf.mxu0
        %v480 = vadd.f32 %v292, %v479
        %v481 = vpop.f32.mrf.mxu0
        %v482 = vadd.f32 %v292, %v481
        %483 = vmatmul.bf16.gmra.mxu0 %v412
        %v484 = vpop.f32.mrf.mxu0
        %v485 = vadd.f32 %v292, %v484
        %v486 = vpop.f32.mrf.mxu0
        %v487 = vadd.f32 %v292, %v486
        %488 = vmatmul.bf16.gmra.mxu0 %v415
        %v489 = vpop.f32.mrf.mxu0
        %v490 = vadd.f32 %v292, %v489
        %v491 = vpop.f32.mrf.mxu0
        %v492 = vadd.f32 %v292, %v491
        %493 = vmatmul.bf16.gmra.mxu0 %v418
        %v494 = vpop.f32.mrf.mxu0
        %v495 = vadd.f32 %v292, %v494
        %v496 = vpop.f32.mrf.mxu0
        %v497 = vadd.f32 %v292, %v496
        %498 = vmatmul.bf16.gmra.mxu0 %v421
        %v499 = vpop.f32.mrf.mxu0
        %v500 = vadd.f32 %v292, %v499
        %v501 = vpop.f32.mrf.mxu0
        %v502 = vadd.f32 %v292, %v501
        %503 = vmatmul.bf16.gmra.mxu0 %v424
        %v504 = vpop.f32.mrf.mxu0
        %v505 = vadd.f32 %v292, %v504
        %v506 = vpop.f32.mrf.mxu0
        %v507 = vadd.f32 %v292, %v506
        %508 = vmatmul.bf16.gmra.mxu0 %v427
        %v509 = vpop.f32.mrf.mxu0
        %v510 = vadd.f32 %v292, %v509
        %v511 = vpop.f32.mrf.mxu0
        %v512 = vadd.f32 %v292, %v511
        %513 = vmatmul.bf16.gmra.mxu0 %v430
        %v514 = vpop.f32.mrf.mxu0
        %v515 = vadd.f32 %v292, %v514
        %v516 = vpop.f32.mrf.mxu0
        %v517 = vadd.f32 %v292, %v516
        %518 = vmatmul.bf16.gmra.mxu0 %v433
        %v519 = vpop.f32.mrf.mxu0
        %v520 = vadd.f32 %v292, %v519
        %v521 = vpop.f32.mrf.mxu0
        %v522 = vadd.f32 %v292, %v521
        %523 = vdwg.mxu0
        %v524 = vmax.f32 %v445, 0.0
        %v525 = vmax.f32 %v447, 0.0
        %v526 = vmax.f32 %v450, 0.0
        %v527 = vmax.f32 %v452, 0.0
        %v528 = vmax.f32 %v455, 0.0
        %v529 = vmax.f32 %v457, 0.0
        %v530 = vmax.f32 %v460, 0.0
        %v531 = vmax.f32 %v462, 0.0
        %v532 = vmax.f32 %v465, 0.0
        %v533 = vmax.f32 %v467, 0.0
        %v534 = vmax.f32 %v470, 0.0
        %v535 = vmax.f32 %v472, 0.0
        %v536 = vmax.f32 %v475, 0.0
        %v537 = vmax.f32 %v477, 0.0
        %v538 = vmax.f32 %v480, 0.0
        %v539 = vmax.f32 %v482, 0.0
        %v540 = vmax.f32 %v485, 0.0
        %v541 = vmax.f32 %v487, 0.0
        %v542 = vmax.f32 %v490, 0.0
        %v543 = vmax.f32 %v492, 0.0
        %v544 = vmax.f32 %v495, 0.0
        %v545 = vmax.f32 %v497, 0.0
        %v546 = vmax.f32 %v500, 0.0
        %v547 = vmax.f32 %v502, 0.0
        %v548 = vmax.f32 %v505, 0.0
        %v549 = vmax.f32 %v507, 0.0
        %v550 = vmax.f32 %v510, 0.0
        %v551 = vmax.f32 %v512, 0.0
        %v552 = vmax.f32 %v515, 0.0
        %v553 = vmax.f32 %v517, 0.0
        %v554 = vmax.f32 %v520, 0.0
        %v555 = vmax.f32 %v522, 0.0
        %v556 = vpack.c.bf16 %v524, %v524
        %v557 = vpack.c.bf16 %v525, %v525
        %v558 = vpack.c.bf16 %v526, %v526
        %v559 = vpack.c.bf16 %v527, %v527
        %v560 = vpack.c.bf16 %v528, %v528
        %v561 = vpack.c.bf16 %v529, %v529
        %v562 = vpack.c.bf16 %v530, %v530
        %v563 = vpack.c.bf16 %v531, %v531
        %v564 = vpack.c.bf16 %v532, %v532
        %v565 = vpack.c.bf16 %v533, %v533
        %v566 = vpack.c.bf16 %v534, %v534
        %v567 = vpack.c.bf16 %v535, %v535
        %v568 = vpack.c.bf16 %v536, %v536
        %v569 = vpack.c.bf16 %v537, %v537
        %v570 = vpack.c.bf16 %v538, %v538
        %v571 = vpack.c.bf16 %v539, %v539
        %v572 = vpack.c.bf16 %v540, %v540
        %v573 = vpack.c.bf16 %v541, %v541
        %v574 = vpack.c.bf16 %v542, %v542
        %v575 = vpack.c.bf16 %v543, %v543
        %v576 = vpack.c.bf16 %v544, %v544
        %v577 = vpack.c.bf16 %v545, %v545
        %v578 = vpack.c.bf16 %v546, %v546
        %v579 = vpack.c.bf16 %v547, %v547
        %v580 = vpack.c.bf16 %v548, %v548
        %v581 = vpack.c.bf16 %v549, %v549
        %v582 = vpack.c.bf16 %v550, %v550
        %v583 = vpack.c.bf16 %v551, %v551
        %v584 = vpack.c.bf16 %v552, %v552
        %v585 = vpack.c.bf16 %v553, %v553
        %v586 = vpack.c.bf16 %v554, %v554
        %v587 = vpack.c.bf16 %v555, %v555
        %vm588 = vcmask 519168
        %589 = vst.msk [vmem:[%s245] sm:$0xf] %vm588, %v556
        %590 = vst.msk [vmem:[%s245 + $0x4] sm:$0xf] %vm588, %v557
        %591 = vst.msk [vmem:[%s245 + $0x8] sm:$0xf] %vm588, %v558
        %592 = vst.msk [vmem:[%s245 + $0xc] sm:$0xf] %vm588, %v559
        %593 = vst.msk [vmem:[%s245 + $0x10] sm:$0xf] %vm588, %v560
        %594 = vst.msk [vmem:[%s245 + $0x14] sm:$0xf] %vm588, %v561
        %595 = vst.msk [vmem:[%s245 + $0x18] sm:$0xf] %vm588, %v562
        %596 = vst.msk [vmem:[%s245 + $0x1c] sm:$0xf] %vm588, %v563
        %597 = vst.msk [vmem:[%s245 + $0x20] sm:$0xf] %vm588, %v564
        %598 = vst.msk [vmem:[%s245 + $0x24] sm:$0xf] %vm588, %v565
        %599 = vst.msk [vmem:[%s245 + $0x28] sm:$0xf] %vm588, %v566
        %600 = vst.msk [vmem:[%s245 + $0x2c] sm:$0xf] %vm588, %v567
        %601 = vst.msk [vmem:[%s245 + $0x30] sm:$0xf] %vm588, %v568
        %602 = vst.msk [vmem:[%s245 + $0x34] sm:$0xf] %vm588, %v569
        %603 = vst.msk [vmem:[%s245 + $0x38] sm:$0xf] %vm588, %v570
        %604 = vst.msk [vmem:[%s245 + $0x3c] sm:$0xf] %vm588, %v571
        %605 = vst.msk [vmem:[%s245 + $0x40] sm:$0xf] %vm588, %v572
        %606 = vst.msk [vmem:[%s245 + $0x44] sm:$0xf] %vm588, %v573
        %607 = vst.msk [vmem:[%s245 + $0x48] sm:$0xf] %vm588, %v574
        %608 = vst.msk [vmem:[%s245 + $0x4c] sm:$0xf] %vm588, %v575
        %609 = vst.msk [vmem:[%s245 + $0x50] sm:$0xf] %vm588, %v576
        %610 = vst.msk [vmem:[%s245 + $0x54] sm:$0xf] %vm588, %v577
        %611 = vst.msk [vmem:[%s245 + $0x58] sm:$0xf] %vm588, %v578
        %612 = vst.msk [vmem:[%s245 + $0x5c] sm:$0xf] %vm588, %v579
        %613 = vst.msk [vmem:[%s245 + $0x60] sm:$0xf] %vm588, %v580
        %614 = vst.msk [vmem:[%s245 + $0x64] sm:$0xf] %vm588, %v581
        %615 = vst.msk [vmem:[%s245 + $0x68] sm:$0xf] %vm588, %v582
        %616 = vst.msk [vmem:[%s245 + $0x6c] sm:$0xf] %vm588, %v583
        %617 = vst.msk [vmem:[%s245 + $0x70] sm:$0xf] %vm588, %v584
        %618 = vst.msk [vmem:[%s245 + $0x74] sm:$0xf] %vm588, %v585
        %619 = vst.msk [vmem:[%s245 + $0x78] sm:$0xf] %vm588, %v586
        %620 = vst.msk [vmem:[%s245 + $0x7c] sm:$0xf] %vm588, %v587
        %v621 = vld [vmem:[#allocation2] sm:$0x1]
        %v622 = vunpack.c.l.bf16 %v254
        %v623 = vunpack.c.l.bf16 %v255
        %v624 = vunpack.c.l.bf16 %v256
        %v625 = vunpack.c.l.bf16 %v257
        %v626 = vunpack.c.l.bf16 %v258
        %v627 = vunpack.c.l.bf16 %v259
        %v628 = vunpack.c.l.bf16 %v260
        %v629 = vunpack.c.l.bf16 %v261
        %v630 = vunpack.c.l.bf16 %v262
        %v631 = vunpack.c.l.bf16 %v263
        %v632 = vunpack.c.l.bf16 %v264
        %v633 = vunpack.c.l.bf16 %v265
        %v634 = vunpack.c.l.bf16 %v266
        %v635 = vunpack.c.l.bf16 %v267
        %v636 = vunpack.c.l.bf16 %v268
        %v637 = vunpack.c.l.bf16 %v269
        %v638 = vunpack.c.l.bf16 %v270
        %v639 = vunpack.c.l.bf16 %v271
        %v640 = vunpack.c.l.bf16 %v272
        %v641 = vunpack.c.l.bf16 %v273
        %v642 = vunpack.c.l.bf16 %v274
        %v643 = vunpack.c.l.bf16 %v275
        %v644 = vunpack.c.l.bf16 %v276
        %v645 = vunpack.c.l.bf16 %v277
        %v646 = vunpack.c.l.bf16 %v278
        %v647 = vunpack.c.l.bf16 %v279
        %v648 = vunpack.c.l.bf16 %v280
        %v649 = vunpack.c.l.bf16 %v281
        %v650 = vunpack.c.l.bf16 %v282
        %v651 = vunpack.c.l.bf16 %v283
        %v652 = vunpack.c.l.bf16 %v284
        %v653 = vunpack.c.l.bf16 %v285
        %v654 = vsel %vm386, %v622, 0.0
        %v655 = vsel %vm386, %v623, 0.0
        %v656 = vadd.f32 %v654, %v655
        %v657 = vsel %vm386, %v624, 0.0
        %v658 = vadd.f32 %v656, %v657
        %v659 = vsel %vm386, %v625, 0.0
        %v660 = vadd.f32 %v658, %v659
        %v661 = vsel %vm386, %v626, 0.0
        %v662 = vadd.f32 %v660, %v661
        %v663 = vsel %vm386, %v627, 0.0
        %v664 = vadd.f32 %v662, %v663
        %v665 = vsel %vm386, %v628, 0.0
        %v666 = vadd.f32 %v664, %v665
        %v667 = vsel %vm386, %v629, 0.0
        %v668 = vadd.f32 %v666, %v667
        %v669 = vsel %vm386, %v630, 0.0
        %v670 = vadd.f32 %v668, %v669
        %v671 = vsel %vm386, %v631, 0.0
        %v672 = vadd.f32 %v670, %v671
        %v673 = vsel %vm386, %v632, 0.0
        %v674 = vadd.f32 %v672, %v673
        %v675 = vsel %vm386, %v633, 0.0
        %v676 = vadd.f32 %v674, %v675
        %v677 = vsel %vm386, %v634, 0.0
        %v678 = vadd.f32 %v676, %v677
        %v679 = vsel %vm386, %v635, 0.0
        %v680 = vadd.f32 %v678, %v679
        %v681 = vsel %vm386, %v636, 0.0
        %v682 = vadd.f32 %v680, %v681
        %v683 = vsel %vm386, %v637, 0.0
        %v684 = vadd.f32 %v682, %v683
        %v685 = vsel %vm386, %v638, 0.0
        %v686 = vadd.f32 %v684, %v685
        %v687 = vsel %vm386, %v639, 0.0
        %v688 = vadd.f32 %v686, %v687
        %v689 = vsel %vm386, %v640, 0.0
        %v690 = vadd.f32 %v688, %v689
        %v691 = vsel %vm386, %v641, 0.0
        %v692 = vadd.f32 %v690, %v691
        %v693 = vsel %vm386, %v642, 0.0
        %v694 = vadd.f32 %v692, %v693
        %v695 = vsel %vm386, %v643, 0.0
        %v696 = vadd.f32 %v694, %v695
        %v697 = vsel %vm386, %v644, 0.0
        %v698 = vadd.f32 %v696, %v697
        %v699 = vsel %vm386, %v645, 0.0
        %v700 = vadd.f32 %v698, %v699
        %v701 = vsel %vm386, %v646, 0.0
        %v702 = vadd.f32 %v700, %v701
        %v703 = vsel %vm386, %v647, 0.0
        %v704 = vadd.f32 %v702, %v703
        %v705 = vsel %vm386, %v648, 0.0
        %v706 = vadd.f32 %v704, %v705
        %v707 = vsel %vm386, %v649, 0.0
        %v708 = vadd.f32 %v706, %v707
        %v709 = vsel %vm386, %v650, 0.0
        %v710 = vadd.f32 %v708, %v709
        %v711 = vsel %vm386, %v651, 0.0
        %v712 = vadd.f32 %v710, %v711
        %v713 = vsel %vm386, %v652, 0.0
        %v714 = vadd.f32 %v712, %v713
        %v715 = vsel %vm386, %v653, 0.0
        %v716 = vadd.f32 %v714, %v715
        %v717 = vrot.slane %v716, 4
        %v718 = vadd.f32 %v716, %v717
        %v719 = vrot.slane %v718, 2
        %v720 = vadd.f32 %v718, %v719
        %v721 = vrot.slane %v720, 1
        %v722 = vadd.f32 %v720, %v721
        %v723 = vadd.f32 %v621, %v722
        %vm724 = vcmask 253952
        %725 = vst.msk [vmem:[#allocation2] sm:$0x1] %vm724, %v723
        // Predicated region
        $region37: #{tpu_custom_call.1} parent=31 // pred_check
          %p726 = pneg %p248
        $region38: #{tpu_custom_call.1} parent=31 // pred_check_branch
          %728 = sbr.rel (%p726) target = $region40
        $region39: #{tpu_custom_call.1} parent=31 // pred_region
          %v729 = vld [vmem:[#allocation2] sm:$0x1]
          %v730 = vmul.f32 %v729, 0.00390625
          %731 = vst.msk [vmem:[%s226] sm:$0x1] %vm724, %v730
        $region40: #{tpu_custom_call.1} parent=31 // pred_fallthru
          _
        %s732 = smul.u32 32, %s24
        %p733 = scmp.lt.s32.totalorder %s23, 1
        %s734 = scalar_select %p733, %s23, 1
        %p735 = scmp.lt.s32.totalorder %s732, 31
        %s736 = scalar_select %p735, %s732, 31
        %s737 = smul.addr %s734, 32
        %s738 = sadd.s32 %s736, %s737
        %s739 = smul.addr %s738, 4
        %s740 = scalar_lea.vmem %s3, %s739
        %s741 = sand.u32 %s137, 1
        %s742 = scalar_lea.sflag [#allocation4], %s741
        %s743 = sand.u32 %s137, 1
        %s744 = scalar_lea.vmem [#allocation3], %s743
        // Predicated region
        $region41: #{tpu_custom_call.1} parent=31 // pred_check
          %p745 = pneg %p121
        $region42: #{tpu_custom_call.1} parent=31 // pred_check_branch
          %747 = sbr.rel (%p745) target = $region44
        $region43: #{tpu_custom_call.1} parent=31 // pred_region
          %s748 = smul.u32 32, %s24
        $region44: #{tpu_custom_call.1} parent=31 // pred_fallthru
          _
        // Predicated region
        $region45: #{tpu_custom_call.1} parent=31 // pred_check
          %p749 = pneg %p147
        $region46: #{tpu_custom_call.1} parent=31 // pred_check_branch
          %751 = sbr.rel (%p749) target = $region48
        $region47: #{tpu_custom_call.1} parent=31 // pred_region
          %753 = vsyncadd %s742, 0
          %s754 = scalar_lea.hbm %s4, %s23
          %s756 = sshll.u32 %s744, 4
          %s757 = int_to_ptr.vmem [resolvable:$true] %s756
          %s758 = sshll.u32 %s754, 4
          %s759 = int_to_ptr.hbm [resolvable:$true] %s758
          %761 = dma.vmem_to_hbm [thread:$0]  %s757, 16, %s759, %s742
        $region48: #{tpu_custom_call.1} parent=31 // pred_fallthru
          _
      $region32: #{tpu_custom_call.1} parent=5 // pred_fallthru
        _
      %p762 = scmp.le.s32.totalorder 2, %s14
      // Predicated region
      $region49: #{tpu_custom_call.1} parent=5 // pred_check
        %p763 = pneg %p762
      $region50: #{tpu_custom_call.1} parent=5 // pred_check_branch
        %765 = sbr.rel (%p763) target = $region52
      $region51: #{tpu_custom_call.1} parent=5 // pred_region
        %s766 = ssub.s32 %s14, 2
        // Predicated region
        $region53: #{tpu_custom_call.1} parent=51 // pred_check
          %p767 = pneg %p127
        $region54: #{tpu_custom_call.1} parent=51 // pred_check_branch
          %769 = sbr.rel (%p767) target = $region56
        $region55: #{tpu_custom_call.1} parent=51 // pred_region
          %s770 = smul.u32 32, %s26
          %p771 = scmp.lt.s32.totalorder %s25, 1
          %s772 = scalar_select %p771, %s25, 1
          %p773 = scmp.lt.s32.totalorder %s770, 31
          %s774 = scalar_select %p773, %s770, 31
          %s775 = smul.addr %s772, 32
          %s776 = sadd.s32 %s774, %s775
          %s777 = smul.addr %s776, 4
          %s778 = scalar_lea.vmem %s3, %s777
        $region56: #{tpu_custom_call.1} parent=51 // pred_fallthru
          _
        // Predicated region
        $region57: #{tpu_custom_call.1} parent=51 // pred_check
          %p779 = pneg %p153
        $region58: #{tpu_custom_call.1} parent=51 // pred_check_branch
          %781 = sbr.rel (%p779) target = $region60
        $region59: #{tpu_custom_call.1} parent=51 // pred_region
          %s782 = sand.u32 %s138, 1
          %s783 = scalar_lea.sflag [#allocation4], %s782
          %s784 = sand.u32 %s138, 1
          %s785 = scalar_lea.vmem [#allocation3], %s784
          %787 = dma.done %s783, 16
        $region60: #{tpu_custom_call.1} parent=51 // pred_fallthru
          _
      $region52: #{tpu_custom_call.1} parent=5 // pred_fallthru
        _
    $region6: #{tpu_custom_call.1} parent=1 // loop_footer
      %s18 = sadd.s32 1, %s14
    $region7: #{tpu_custom_call.1} parent=1 // loop_footer_branch
      %13 = sbr.rel target = $region3
    $region8: #{tpu_custom_call.1} parent=1 // loop_exit
      _
    %788 = vsyncpa [#allocation4], 1
    %s789 = scalar_lea.sflag [#allocation4], 1
    %790 = vsyncpa %s789, 1

</llo_original>
